<compile_context>
chip_gen: v7x
topology: tpu7x:2x2x1
jax: 0.10.0
libtpu: 0.0.40
codegen_flags: <defaults>
</compile_context>

<pallas_src>
import jax
import jax.numpy as jnp
from jax import lax
from jax.experimental import pallas as pl
from jax.experimental.pallas import tpu as pltpu

# ---------------- small demo hyper-parameters ----------------
B = 2              # batch
SEQ = 8            # input sequence length
INPUT_DIM = 4      # continuous input feature dim
EMBED_DIM = 32     # embedding dim
HIDDEN_DIM = EMBED_DIM // 2
OUTPUT_DIM = 3     # regression output feature dim
OUTPUT_LEN = 4     # output sequence length
NUM_LAYERS = 2     # number of EnhancedTFNLayer blocks
GRID_SIZE = 64     # field grid points
NUM_STEPS = 4      # diffusion steps inside UnifiedFieldDynamics
MAX_SEQ_LEN = 64   # positional table size
LN_EPS = 1e-5
RBF_SIGMA = 0.2    # fixed RBF width for FieldProjector
DIFF_COEFF = 0.1   # diffusion coefficient for UnifiedFieldDynamics
LANE_PAD = 128     # lane-dense width for the packed constants / output


# ---------------- packed-constants layout (static row offsets) ----------------
def _align8(n):
    return ((n + 7) // 8) * 8


OFF_W_IN = 0                                              # (INPUT_DIM, D)
OFF_PE0  = OFF_W_IN + _align8(INPUT_DIM)                  # (SEQ, D)   pos_emb[:N] + b_in
OFF_M    = OFF_PE0 + _align8(SEQ)                         # (SEQ, SEQ) folded field operator
OFF_C    = OFF_M + _align8(SEQ)                           # (L*SEQ, D) (M+I) @ pe_layer
OFF_WOUT = OFF_C + _align8(NUM_LAYERS * SEQ)              # (L*D, D)   per-layer output_proj
OFF_W1   = OFF_WOUT + _align8(NUM_LAYERS * EMBED_DIM)     # (D, H)     head linear 1
OFF_W2   = OFF_W1 + _align8(EMBED_DIM)                    # (H, 128)   head linear 2 (lane-padded)
OFF_VEC  = OFF_W2 + _align8(HIDDEN_DIM)                   # 1-row vectors (see below)
NUM_VEC_ROWS = 5 * NUM_LAYERS + 4                         # per layer: b_out,g1,bt1,g2,bt2 ; + gf,bf,b1,b2
CONST_ROWS = OFF_VEC + _align8(NUM_VEC_ROWS)


# ---------------- in-kernel helpers ----------------
def _layernorm(x, gamma, beta, eps=LN_EPS):
    mu = jnp.mean(x, axis=-1, keepdims=True)
    var = jnp.mean((x - mu) ** 2, axis=-1, keepdims=True)
    return (x - mu) * lax.rsqrt(var + eps) * gamma + beta


# ---------------- fused forward kernel (one program per batch element) ----------------
def fused_forward_kernel(x_ref, c_ref, o_ref):
    D, H, N = EMBED_DIM, HIDDEN_DIM, SEQ

    x_in = x_ref[0]                                             # (N, INPUT_DIM)
    w_in = c_ref[OFF_W_IN:OFF_W_IN + INPUT_DIM, :D]             # (INPUT_DIM, D)
    pe0 = c_ref[OFF_PE0:OFF_PE0 + N, :D]                        # (N, D)  pos_emb + b_in
    M = c_ref[OFF_M:OFF_M + N, :N]                              # (N, N)

    # Input projection + regressor positional embedding (+ folded bias).
    x = jnp.dot(x_in, w_in, preferred_element_type=jnp.float32) + pe0

    # EnhancedTFNLayer stack (static unrolled; L=2).
    for l in range(NUM_LAYERS):
        c_l = c_ref[OFF_C + l * N:OFF_C + (l + 1) * N, :D]      # (N, D)
        w_o = c_ref[OFF_WOUT + l * D:OFF_WOUT + (l + 1) * D, :D]
        vb = OFF_VEC + 5 * l
        b_o = c_ref[vb + 0:vb + 1, :D]
        g1 = c_ref[vb + 1:vb + 2, :D]
        bt1 = c_ref[vb + 2:vb + 3, :D]
        g2 = c_ref[vb + 3:vb + 4, :D]
        bt2 = c_ref[vb + 4:vb + 5, :D]

        # Folded field pipeline: sampled + emb = M@x + x + (M+I)@pe_l.
        t = jnp.dot(M, x, preferred_element_type=jnp.float32) + x + c_l
        h = _layernorm(t, g1, bt1)
        y = jnp.dot(h, w_o, preferred_element_type=jnp.float32) + b_o   # dropout = identity (eval)
        x = _layernorm(y + h, g2, bt2)

    vb = OFF_VEC + 5 * NUM_LAYERS
    gf = c_ref[vb + 0:vb + 1, :D]
    bf = c_ref[vb + 1:vb + 2, :D]
    b1 = c_ref[vb + 2:vb + 3, :H]
    b2 = c_ref[vb + 3:vb + 4, :]                                # (1, LANE_PAD)

    # Final LayerNorm.
    x = _layernorm(x, gf, bf)

    # Regression head on ALL N rows (tail slice done in the wrapper):
    # Linear -> ReLU -> (Dropout: identity) -> Linear, lane-dense output.
    w1 = c_ref[OFF_W1:OFF_W1 + D, :H]                           # (D, H)
    w2 = c_ref[OFF_W2:OFF_W2 + H, :]                            # (H, LANE_PAD)
    hh = jnp.maximum(jnp.dot(x, w1, preferred_element_type=jnp.float32) + b1, 0.0)
    o_ref[0] = jnp.dot(hh, w2, preferred_element_type=jnp.float32) + b2


# ---------------- host-side constant construction ----------------
def _positions(n):
    return jnp.arange(n, dtype=jnp.float32) / float(max(n - 1, 1))


def build_field_matrix(n, g):
    """M = S @ (I + c*L)^num_steps @ K  — position-only, shape (n, n)."""
    pos = _positions(n)                                          # (n,)
    grid = jnp.linspace(0.0, 1.0, g, dtype=jnp.float32)          # (g,)

    # RBF projection kernel K[g, n].
    diff = grid[:, None] - pos[None, :]
    K = jnp.exp(-(diff * diff) / (2.0 * RBF_SIGMA * RBF_SIGMA))

    # Diffusion operator A = I + c * Laplacian (boundary diag = -1).
    gi = jnp.arange(g)
    off = (jnp.abs(gi[:, None] - gi[None, :]) == 1).astype(jnp.float32)
    diag = jnp.where((gi == 0) | (gi == g - 1), -1.0, -2.0)
    lap = off + jnp.diag(diag)
    A = jnp.eye(g, dtype=jnp.float32) + DIFF_COEFF * lap
    Apow = jnp.eye(g, dtype=jnp.float32)
    for _ in range(NUM_STEPS):
        Apow = A @ Apow

    # Linear-interpolation sampling matrix S[n, g].
    u = pos * (g - 1)
    i0 = jnp.clip(jnp.floor(u).astype(jnp.int32), 0, g - 1)
    i1 = jnp.minimum(i0 + 1, g - 1)
    frac = u - i0.astype(jnp.float32)
    g_iota = jnp.arange(g)[None, :]
    S = (jnp.where(g_iota == i0[:, None], 1.0 - frac[:, None], 0.0)
         + jnp.where(g_iota == i1[:, None], frac[:, None], 0.0))

    return S @ (Apow @ K)                                        # (n, n)


def build_constants(params, n):
    """Pack every weight / folded operator into one (CONST_ROWS, 128) slab."""
    D, H, L = EMBED_DIM, HIDDEN_DIM, NUM_LAYERS
    c = jnp.zeros((CONST_ROWS, LANE_PAD), jnp.float32)

    M = build_field_matrix(n, GRID_SIZE)                         # (n, n)
    pe0 = params["pos_embedding"][:n] + params["b_in"][None, :]  # pos emb + folded b_in

    c = c.at[OFF_W_IN:OFF_W_IN + INPUT_DIM, :D].set(params["w_in"])
    c = c.at[OFF_PE0:OFF_PE0 + n, :D].set(pe0)
    c = c.at[OFF_M:OFF_M + n, :n].set(M)

    # Learned per-layer positional embedding: index = round(pos*(max_len-1)).
    pos = _positions(n)
    idx = jnp.clip(jnp.round(pos * (MAX_SEQ_LEN - 1)), 0, MAX_SEQ_LEN - 1).astype(jnp.int32)
    MI = M + jnp.eye(n, dtype=jnp.float32)

    for l, lp in enumerate(params["layers"]):
        pe_l = lp["pos_table"][idx]                              # (n, D)
        c = c.at[OFF_C + l * n:OFF_C + (l + 1) * n, :D].set(MI @ pe_l)
        c = c.at[OFF_WOUT + l * D:OFF_WOUT + (l + 1) * D, :D].set(lp["w_out"])
        vb = OFF_VEC + 5 * l
        c = c.at[vb + 0, :D].set(lp["b_out"])
        c = c.at[vb + 1, :D].set(lp["g1"])
        c = c.at[vb + 2, :D].set(lp["b1"])
        c = c.at[vb + 3, :D].set(lp["g2"])
        c = c.at[vb + 4, :D].set(lp["b2"])

    vb = OFF_VEC + 5 * L
    c = c.at[vb + 0, :D].set(params["final_gamma"])
    c = c.at[vb + 1, :D].set(params["final_beta"])
    c = c.at[vb + 2, :H].set(params["b1"])
    c = c.at[vb + 3, :OUTPUT_DIM].set(params["b2"])

    c = c.at[OFF_W1:OFF_W1 + D, :H].set(params["w1"])
    c = c.at[OFF_W2:OFF_W2 + H, :OUTPUT_DIM].set(params["w2"])
    return c


# ---------------- parameters ----------------
def init_params(key):
    def nrm(k, shape):
        return 0.02 * jax.random.normal(k, shape, dtype=jnp.float32)

    n_keys = 4 + 2 * NUM_LAYERS
    keys = iter(jax.random.split(key, n_keys))

    params = {
        "w_in": nrm(next(keys), (INPUT_DIM, EMBED_DIM)),
        "b_in": jnp.zeros((EMBED_DIM,), jnp.float32),
        "pos_embedding": nrm(next(keys), (MAX_SEQ_LEN, EMBED_DIM)),
        "final_gamma": jnp.ones((EMBED_DIM,), jnp.float32),
        "final_beta": jnp.zeros((EMBED_DIM,), jnp.float32),
        "w1": nrm(next(keys), (EMBED_DIM, HIDDEN_DIM)),
        "b1": jnp.zeros((HIDDEN_DIM,), jnp.float32),
        "w2": nrm(next(keys), (HIDDEN_DIM, OUTPUT_DIM)),
        "b2": jnp.zeros((OUTPUT_DIM,), jnp.float32),
        "layers": [],
    }
    for _ in range(NUM_LAYERS):
        params["layers"].append({
            "pos_table": nrm(next(keys), (MAX_SEQ_LEN, EMBED_DIM)),
            "w_out": nrm(next(keys), (EMBED_DIM, EMBED_DIM)),
            "b_out": jnp.zeros((EMBED_DIM,), jnp.float32),
            "g1": jnp.ones((EMBED_DIM,), jnp.float32),
            "b1": jnp.zeros((EMBED_DIM,), jnp.float32),
            "g2": jnp.ones((EMBED_DIM,), jnp.float32),
            "b2": jnp.zeros((EMBED_DIM,), jnp.float32),
        })
    return params


# ---------------- forward pass ----------------
def forward(params, inputs):
    Bn, n, d_in = inputs.shape
    assert (n, d_in) == (SEQ, INPUT_DIM), (n, d_in)

    consts = build_constants(params, n)                          # (CONST_ROWS, 128)

    out_pad = pl.pallas_call(
        fused_forward_kernel,
        out_shape=jax.ShapeDtypeStruct((Bn, n, LANE_PAD), jnp.float32),
        grid=(Bn,),
        in_specs=[
            pl.BlockSpec((1, n, d_in), lambda b: (b, 0, 0)),          # per-batch activations
            pl.BlockSpec((CONST_ROWS, LANE_PAD), lambda b: (0, 0)),   # constants: DMA'd once
        ],
        out_specs=pl.BlockSpec((1, n, LANE_PAD), lambda b: (b, 0, 0)),
        compiler_params=pltpu.CompilerParams(dimension_semantics=("parallel",)),
    )(inputs, consts)

    y = out_pad[..., :OUTPUT_DIM]                                # (B, N, OUTPUT_DIM)
    if n >= OUTPUT_LEN:
        return y[:, n - OUTPUT_LEN:, :]
    # seq_len < output_len: reference zero-pads x BEFORE the head, so padded
    # rows equal relu(b1) @ w2 + b2 (constant per row).
    pad_row = jnp.maximum(params["b1"], 0.0) @ params["w2"] + params["b2"]
    pad = jnp.broadcast_to(pad_row, (Bn, OUTPUT_LEN - n, OUTPUT_DIM))
    return jnp.concatenate([y, pad], axis=1)


if __name__ == "__main__":
    inputs = jax.random.normal(jax.random.PRNGKey(0), (B, SEQ, INPUT_DIM),
                               dtype=jnp.float32)
    params = init_params(jax.random.PRNGKey(1))

    fwd = jax.jit(forward)
    out = jax.block_until_ready(fwd(params, inputs))
    assert out.shape == (B, OUTPUT_LEN, OUTPUT_DIM), out.shape
    assert bool(jnp.all(jnp.isfinite(out)))
    print("KERNEL_OK")
</pallas_src>

<mosaic_0001>
module attributes {stable_mosaic.version = 11 : i64} {
  func.func @fused_forward_kernel(%arg0: i32, %arg1: memref<1x8x4xf32, #tpu.memory_space<vmem>>, %arg2: memref<168x128xf32, #tpu.memory_space<vmem>>, %arg3: memref<1x8x128xf32, #tpu.memory_space<vmem>>) attributes {dimension_semantics = [#tpu.dimension_semantics<parallel>], iteration_bounds = array<i64: 2>, scalar_prefetch = 0 : i64, scratch_operands = 0 : i64, tpu.core_type = #tpu.core_type<tc>, window_params = [{transform_indices = @transform_0, window_bounds = array<i64: 1, 8, 4>}, {pipeline_mode = #tpu.pipeline_mode<synchronous>, transform_indices = @transform_1, window_bounds = array<i64: 168, 128>}, {transform_indices = @transform_2, window_bounds = array<i64: 1, 8, 128>}]} {
    %c0 = arith.constant 0 : index
    %c0_0 = arith.constant 0 : index
    %c0_1 = arith.constant 0 : index
    %0 = vector.load %arg1[%c0, %c0_0, %c0_1] : memref<1x8x4xf32, #tpu.memory_space<vmem>>, vector<1x8x4xf32>
    %1 = vector.shape_cast %0 : vector<1x8x4xf32> to vector<8x4xf32>
    %c0_2 = arith.constant 0 : index
    %c0_3 = arith.constant 0 : index
    %2 = vector.load %arg2[%c0_2, %c0_3] : memref<168x128xf32, #tpu.memory_space<vmem>>, vector<4x32xf32>
    %c8 = arith.constant 8 : index
    %c0_4 = arith.constant 0 : index
    %3 = vector.load %arg2[%c8, %c0_4] : memref<168x128xf32, #tpu.memory_space<vmem>>, vector<8x32xf32>
    %c16 = arith.constant 16 : index
    %c0_5 = arith.constant 0 : index
    %4 = vector.load %arg2[%c16, %c0_5] : memref<168x128xf32, #tpu.memory_space<vmem>>, vector<8x8xf32>
    %cst = arith.constant dense<0.000000e+00> : vector<8x32xf32>
    %5 = tpu.matmul %1, %2, %cst {dimension_numbers = #tpu.dot_dimension_numbers<[1], [0], [0], [1], [0, 0, 1, 1], [], []>} : vector<8x4xf32>, vector<4x32xf32>, vector<8x32xf32> -> vector<8x32xf32>
    %6 = arith.addf %5, %3 : vector<8x32xf32>
    %c24 = arith.constant 24 : index
    %c0_6 = arith.constant 0 : index
    %7 = vector.load %arg2[%c24, %c0_6] : memref<168x128xf32, #tpu.memory_space<vmem>>, vector<8x32xf32>
    %c40 = arith.constant 40 : index
    %c0_7 = arith.constant 0 : index
    %8 = vector.load %arg2[%c40, %c0_7] : memref<168x128xf32, #tpu.memory_space<vmem>>, vector<32x32xf32>
    %c152 = arith.constant 152 : index
    %c0_8 = arith.constant 0 : index
    %9 = vector.load %arg2[%c152, %c0_8] : memref<168x128xf32, #tpu.memory_space<vmem>>, vector<1x32xf32>
    %c153 = arith.constant 153 : index
    %c0_9 = arith.constant 0 : index
    %10 = vector.load %arg2[%c153, %c0_9] : memref<168x128xf32, #tpu.memory_space<vmem>>, vector<1x32xf32>
    %c154 = arith.constant 154 : index
    %c0_10 = arith.constant 0 : index
    %11 = vector.load %arg2[%c154, %c0_10] : memref<168x128xf32, #tpu.memory_space<vmem>>, vector<1x32xf32>
    %c155 = arith.constant 155 : index
    %c0_11 = arith.constant 0 : index
    %12 = vector.load %arg2[%c155, %c0_11] : memref<168x128xf32, #tpu.memory_space<vmem>>, vector<1x32xf32>
    %c156 = arith.constant 156 : index
    %c0_12 = arith.constant 0 : index
    %13 = vector.load %arg2[%c156, %c0_12] : memref<168x128xf32, #tpu.memory_space<vmem>>, vector<1x32xf32>
    %cst_13 = arith.constant dense<0.000000e+00> : vector<8x32xf32>
    %14 = tpu.matmul %4, %6, %cst_13 {dimension_numbers = #tpu.dot_dimension_numbers<[1], [0], [0], [1], [0, 0, 1, 1], [], []>} : vector<8x8xf32>, vector<8x32xf32>, vector<8x32xf32> -> vector<8x32xf32>
    %15 = arith.addf %14, %6 : vector<8x32xf32>
    %16 = arith.addf %15, %7 : vector<8x32xf32>
    %cst_14 = arith.constant dense<0.000000e+00> : vector<8xf32>
    %17 = vector.multi_reduction <add>, %16, %cst_14 [1] : vector<8x32xf32> to vector<8xf32>
    %18 = vector.shape_cast %17 : vector<8xf32> to vector<8x1xf32>
    %cst_15 = arith.constant 3.200000e+01 : f32
    %19 = vector.broadcast %cst_15 : f32 to vector<8x1xf32>
    %20 = arith.divf %18, %19 : vector<8x1xf32>
    %21 = vector.broadcast %20 : vector<8x1xf32> to vector<8x32xf32>
    %22 = arith.subf %16, %21 : vector<8x32xf32>
    %23 = arith.mulf %22, %22 : vector<8x32xf32>
    %cst_16 = arith.constant dense<0.000000e+00> : vector<8xf32>
    %24 = vector.multi_reduction <add>, %23, %cst_16 [1] : vector<8x32xf32> to vector<8xf32>
    %25 = vector.shape_cast %24 : vector<8xf32> to vector<8x1xf32>
    %cst_17 = arith.constant 3.200000e+01 : f32
    %26 = vector.broadcast %cst_17 : f32 to vector<8x1xf32>
    %27 = arith.divf %25, %26 : vector<8x1xf32>
    %28 = vector.broadcast %20 : vector<8x1xf32> to vector<8x32xf32>
    %29 = arith.subf %16, %28 : vector<8x32xf32>
    %cst_18 = arith.constant 9.99999974E-6 : f32
    %30 = vector.broadcast %cst_18 : f32 to vector<8x1xf32>
    %31 = arith.addf %27, %30 : vector<8x1xf32>
    %32 = math.rsqrt %31 : vector<8x1xf32>
    %33 = vector.broadcast %32 : vector<8x1xf32> to vector<8x32xf32>
    %34 = arith.mulf %29, %33 : vector<8x32xf32>
    %35 = vector.broadcast %10 : vector<1x32xf32> to vector<8x32xf32>
    %36 = arith.mulf %34, %35 : vector<8x32xf32>
    %37 = vector.broadcast %11 : vector<1x32xf32> to vector<8x32xf32>
    %38 = arith.addf %36, %37 : vector<8x32xf32>
    %cst_19 = arith.constant dense<0.000000e+00> : vector<8x32xf32>
    %39 = tpu.matmul %38, %8, %cst_19 {dimension_numbers = #tpu.dot_dimension_numbers<[1], [0], [0], [1], [0, 0, 1, 1], [], []>} : vector<8x32xf32>, vector<32x32xf32>, vector<8x32xf32> -> vector<8x32xf32>
    %40 = vector.broadcast %9 : vector<1x32xf32> to vector<8x32xf32>
    %41 = arith.addf %39, %40 : vector<8x32xf32>
    %42 = arith.addf %41, %38 : vector<8x32xf32>
    %cst_20 = arith.constant dense<0.000000e+00> : vector<8xf32>
    %43 = vector.multi_reduction <add>, %42, %cst_20 [1] : vector<8x32xf32> to vector<8xf32>
    %44 = vector.shape_cast %43 : vector<8xf32> to vector<8x1xf32>
    %cst_21 = arith.constant 3.200000e+01 : f32
    %45 = vector.broadcast %cst_21 : f32 to vector<8x1xf32>
    %46 = arith.divf %44, %45 : vector<8x1xf32>
    %47 = vector.broadcast %46 : vector<8x1xf32> to vector<8x32xf32>
    %48 = arith.subf %42, %47 : vector<8x32xf32>
    %49 = arith.mulf %48, %48 : vector<8x32xf32>
    %cst_22 = arith.constant dense<0.000000e+00> : vector<8xf32>
    %50 = vector.multi_reduction <add>, %49, %cst_22 [1] : vector<8x32xf32> to vector<8xf32>
    %51 = vector.shape_cast %50 : vector<8xf32> to vector<8x1xf32>
    %cst_23 = arith.constant 3.200000e+01 : f32
    %52 = vector.broadcast %cst_23 : f32 to vector<8x1xf32>
    %53 = arith.divf %51, %52 : vector<8x1xf32>
    %54 = vector.broadcast %46 : vector<8x1xf32> to vector<8x32xf32>
    %55 = arith.subf %42, %54 : vector<8x32xf32>
    %cst_24 = arith.constant 9.99999974E-6 : f32
    %56 = vector.broadcast %cst_24 : f32 to vector<8x1xf32>
    %57 = arith.addf %53, %56 : vector<8x1xf32>
    %58 = math.rsqrt %57 : vector<8x1xf32>
    %59 = vector.broadcast %58 : vector<8x1xf32> to vector<8x32xf32>
    %60 = arith.mulf %55, %59 : vector<8x32xf32>
    %61 = vector.broadcast %12 : vector<1x32xf32> to vector<8x32xf32>
    %62 = arith.mulf %60, %61 : vector<8x32xf32>
    %63 = vector.broadcast %13 : vector<1x32xf32> to vector<8x32xf32>
    %64 = arith.addf %62, %63 : vector<8x32xf32>
    %c32 = arith.constant 32 : index
    %c0_25 = arith.constant 0 : index
    %65 = vector.load %arg2[%c32, %c0_25] : memref<168x128xf32, #tpu.memory_space<vmem>>, vector<8x32xf32>
    %c72 = arith.constant 72 : index
    %c0_26 = arith.constant 0 : index
    %66 = vector.load %arg2[%c72, %c0_26] : memref<168x128xf32, #tpu.memory_space<vmem>>, vector<32x32xf32>
    %c157 = arith.constant 157 : index
    %c0_27 = arith.constant 0 : index
    %67 = vector.load %arg2[%c157, %c0_27] : memref<168x128xf32, #tpu.memory_space<vmem>>, vector<1x32xf32>
    %c158 = arith.constant 158 : index
    %c0_28 = arith.constant 0 : index
    %68 = vector.load %arg2[%c158, %c0_28] : memref<168x128xf32, #tpu.memory_space<vmem>>, vector<1x32xf32>
    %c159 = arith.constant 159 : index
    %c0_29 = arith.constant 0 : index
    %69 = vector.load %arg2[%c159, %c0_29] : memref<168x128xf32, #tpu.memory_space<vmem>>, vector<1x32xf32>
    %c160 = arith.constant 160 : index
    %c0_30 = arith.constant 0 : index
    %70 = vector.load %arg2[%c160, %c0_30] : memref<168x128xf32, #tpu.memory_space<vmem>>, vector<1x32xf32>
    %c161 = arith.constant 161 : index
    %c0_31 = arith.constant 0 : index
    %71 = vector.load %arg2[%c161, %c0_31] : memref<168x128xf32, #tpu.memory_space<vmem>>, vector<1x32xf32>
    %cst_32 = arith.constant dense<0.000000e+00> : vector<8x32xf32>
    %72 = tpu.matmul %4, %64, %cst_32 {dimension_numbers = #tpu.dot_dimension_numbers<[1], [0], [0], [1], [0, 0, 1, 1], [], []>} : vector<8x8xf32>, vector<8x32xf32>, vector<8x32xf32> -> vector<8x32xf32>
    %73 = arith.addf %72, %64 : vector<8x32xf32>
    %74 = arith.addf %73, %65 : vector<8x32xf32>
    %cst_33 = arith.constant dense<0.000000e+00> : vector<8xf32>
    %75 = vector.multi_reduction <add>, %74, %cst_33 [1] : vector<8x32xf32> to vector<8xf32>
    %76 = vector.shape_cast %75 : vector<8xf32> to vector<8x1xf32>
    %cst_34 = arith.constant 3.200000e+01 : f32
    %77 = vector.broadcast %cst_34 : f32 to vector<8x1xf32>
    %78 = arith.divf %76, %77 : vector<8x1xf32>
    %79 = vector.broadcast %78 : vector<8x1xf32> to vector<8x32xf32>
    %80 = arith.subf %74, %79 : vector<8x32xf32>
    %81 = arith.mulf %80, %80 : vector<8x32xf32>
    %cst_35 = arith.constant dense<0.000000e+00> : vector<8xf32>
    %82 = vector.multi_reduction <add>, %81, %cst_35 [1] : vector<8x32xf32> to vector<8xf32>
    %83 = vector.shape_cast %82 : vector<8xf32> to vector<8x1xf32>
    %cst_36 = arith.constant 3.200000e+01 : f32
    %84 = vector.broadcast %cst_36 : f32 to vector<8x1xf32>
    %85 = arith.divf %83, %84 : vector<8x1xf32>
    %86 = vector.broadcast %78 : vector<8x1xf32> to vector<8x32xf32>
    %87 = arith.subf %74, %86 : vector<8x32xf32>
    %cst_37 = arith.constant 9.99999974E-6 : f32
    %88 = vector.broadcast %cst_37 : f32 to vector<8x1xf32>
    %89 = arith.addf %85, %88 : vector<8x1xf32>
    %90 = math.rsqrt %89 : vector<8x1xf32>
    %91 = vector.broadcast %90 : vector<8x1xf32> to vector<8x32xf32>
    %92 = arith.mulf %87, %91 : vector<8x32xf32>
    %93 = vector.broadcast %68 : vector<1x32xf32> to vector<8x32xf32>
    %94 = arith.mulf %92, %93 : vector<8x32xf32>
    %95 = vector.broadcast %69 : vector<1x32xf32> to vector<8x32xf32>
    %96 = arith.addf %94, %95 : vector<8x32xf32>
    %cst_38 = arith.constant dense<0.000000e+00> : vector<8x32xf32>
    %97 = tpu.matmul %96, %66, %cst_38 {dimension_numbers = #tpu.dot_dimension_numbers<[1], [0], [0], [1], [0, 0, 1, 1], [], []>} : vector<8x32xf32>, vector<32x32xf32>, vector<8x32xf32> -> vector<8x32xf32>
    %98 = vector.broadcast %67 : vector<1x32xf32> to vector<8x32xf32>
    %99 = arith.addf %97, %98 : vector<8x32xf32>
    %100 = arith.addf %99, %96 : vector<8x32xf32>
    %cst_39 = arith.constant dense<0.000000e+00> : vector<8xf32>
    %101 = vector.multi_reduction <add>, %100, %cst_39 [1] : vector<8x32xf32> to vector<8xf32>
    %102 = vector.shape_cast %101 : vector<8xf32> to vector<8x1xf32>
    %cst_40 = arith.constant 3.200000e+01 : f32
    %103 = vector.broadcast %cst_40 : f32 to vector<8x1xf32>
    %104 = arith.divf %102, %103 : vector<8x1xf32>
    %105 = vector.broadcast %104 : vector<8x1xf32> to vector<8x32xf32>
    %106 = arith.subf %100, %105 : vector<8x32xf32>
    %107 = arith.mulf %106, %106 : vector<8x32xf32>
    %cst_41 = arith.constant dense<0.000000e+00> : vector<8xf32>
    %108 = vector.multi_reduction <add>, %107, %cst_41 [1] : vector<8x32xf32> to vector<8xf32>
    %109 = vector.shape_cast %108 : vector<8xf32> to vector<8x1xf32>
    %cst_42 = arith.constant 3.200000e+01 : f32
    %110 = vector.broadcast %cst_42 : f32 to vector<8x1xf32>
    %111 = arith.divf %109, %110 : vector<8x1xf32>
    %112 = vector.broadcast %104 : vector<8x1xf32> to vector<8x32xf32>
    %113 = arith.subf %100, %112 : vector<8x32xf32>
    %cst_43 = arith.constant 9.99999974E-6 : f32
    %114 = vector.broadcast %cst_43 : f32 to vector<8x1xf32>
    %115 = arith.addf %111, %114 : vector<8x1xf32>
    %116 = math.rsqrt %115 : vector<8x1xf32>
    %117 = vector.broadcast %116 : vector<8x1xf32> to vector<8x32xf32>
    %118 = arith.mulf %113, %117 : vector<8x32xf32>
    %119 = vector.broadcast %70 : vector<1x32xf32> to vector<8x32xf32>
    %120 = arith.mulf %118, %119 : vector<8x32xf32>
    %121 = vector.broadcast %71 : vector<1x32xf32> to vector<8x32xf32>
    %122 = arith.addf %120, %121 : vector<8x32xf32>
    %c162 = arith.constant 162 : index
    %c0_44 = arith.constant 0 : index
    %123 = vector.load %arg2[%c162, %c0_44] : memref<168x128xf32, #tpu.memory_space<vmem>>, vector<1x32xf32>
    %c163 = arith.constant 163 : index
    %c0_45 = arith.constant 0 : index
    %124 = vector.load %arg2[%c163, %c0_45] : memref<168x128xf32, #tpu.memory_space<vmem>>, vector<1x32xf32>
    %c164 = arith.constant 164 : index
    %c0_46 = arith.constant 0 : index
    %125 = vector.load %arg2[%c164, %c0_46] : memref<168x128xf32, #tpu.memory_space<vmem>>, vector<1x16xf32>
    %c165 = arith.constant 165 : index
    %c0_47 = arith.constant 0 : index
    %126 = vector.load %arg2[%c165, %c0_47] : memref<168x128xf32, #tpu.memory_space<vmem>>, vector<1x128xf32>
    %cst_48 = arith.constant dense<0.000000e+00> : vector<8xf32>
    %127 = vector.multi_reduction <add>, %122, %cst_48 [1] : vector<8x32xf32> to vector<8xf32>
    %128 = vector.shape_cast %127 : vector<8xf32> to vector<8x1xf32>
    %cst_49 = arith.constant 3.200000e+01 : f32
    %129 = vector.broadcast %cst_49 : f32 to vector<8x1xf32>
    %130 = arith.divf %128, %129 : vector<8x1xf32>
    %131 = vector.broadcast %130 : vector<8x1xf32> to vector<8x32xf32>
    %132 = arith.subf %122, %131 : vector<8x32xf32>
    %133 = arith.mulf %132, %132 : vector<8x32xf32>
    %cst_50 = arith.constant dense<0.000000e+00> : vector<8xf32>
    %134 = vector.multi_reduction <add>, %133, %cst_50 [1] : vector<8x32xf32> to vector<8xf32>
    %135 = vector.shape_cast %134 : vector<8xf32> to vector<8x1xf32>
    %cst_51 = arith.constant 3.200000e+01 : f32
    %136 = vector.broadcast %cst_51 : f32 to vector<8x1xf32>
    %137 = arith.divf %135, %136 : vector<8x1xf32>
    %138 = vector.broadcast %130 : vector<8x1xf32> to vector<8x32xf32>
    %139 = arith.subf %122, %138 : vector<8x32xf32>
    %cst_52 = arith.constant 9.99999974E-6 : f32
    %140 = vector.broadcast %cst_52 : f32 to vector<8x1xf32>
    %141 = arith.addf %137, %140 : vector<8x1xf32>
    %142 = math.rsqrt %141 : vector<8x1xf32>
    %143 = vector.broadcast %142 : vector<8x1xf32> to vector<8x32xf32>
    %144 = arith.mulf %139, %143 : vector<8x32xf32>
    %145 = vector.broadcast %123 : vector<1x32xf32> to vector<8x32xf32>
    %146 = arith.mulf %144, %145 : vector<8x32xf32>
    %147 = vector.broadcast %124 : vector<1x32xf32> to vector<8x32xf32>
    %148 = arith.addf %146, %147 : vector<8x32xf32>
    %c104 = arith.constant 104 : index
    %c0_53 = arith.constant 0 : index
    %149 = vector.load %arg2[%c104, %c0_53] : memref<168x128xf32, #tpu.memory_space<vmem>>, vector<32x16xf32>
    %c136 = arith.constant 136 : index
    %c0_54 = arith.constant 0 : index
    %150 = vector.load %arg2[%c136, %c0_54] : memref<168x128xf32, #tpu.memory_space<vmem>>, vector<16x128xf32>
    %cst_55 = arith.constant dense<0.000000e+00> : vector<8x16xf32>
    %151 = tpu.matmul %148, %149, %cst_55 {dimension_numbers = #tpu.dot_dimension_numbers<[1], [0], [0], [1], [0, 0, 1, 1], [], []>} : vector<8x32xf32>, vector<32x16xf32>, vector<8x16xf32> -> vector<8x16xf32>
    %152 = vector.broadcast %125 : vector<1x16xf32> to vector<8x16xf32>
    %153 = arith.addf %151, %152 : vector<8x16xf32>
    %cst_56 = arith.constant 0.000000e+00 : f32
    %154 = vector.broadcast %cst_56 : f32 to vector<8x16xf32>
    %155 = arith.maximumf %153, %154 : vector<8x16xf32>
    %cst_57 = arith.constant dense<0.000000e+00> : vector<8x128xf32>
    %156 = tpu.matmul %155, %150, %cst_57 {dimension_numbers = #tpu.dot_dimension_numbers<[1], [0], [0], [1], [0, 0, 1, 1], [], []>} : vector<8x16xf32>, vector<16x128xf32>, vector<8x128xf32> -> vector<8x128xf32>
    %157 = vector.broadcast %126 : vector<1x128xf32> to vector<8x128xf32>
    %158 = arith.addf %156, %157 : vector<8x128xf32>
    %c0_58 = arith.constant 0 : index
    %c0_59 = arith.constant 0 : index
    %c0_60 = arith.constant 0 : index
    %159 = vector.load %arg3[%c0_58, %c0_59, %c0_60] : memref<1x8x128xf32, #tpu.memory_space<vmem>>, vector<1x8x128xf32>
    %160 = vector.shape_cast %159 : vector<1x8x128xf32> to vector<8x128xf32>
    %161 = vector.shape_cast %158 : vector<8x128xf32> to vector<1x8x128xf32>
    tpu.vector_store %arg3[%c0_58, %c0_59, %c0_60], %161 {strides = array<i32>} : memref<1x8x128xf32, #tpu.memory_space<vmem>>, vector<1x8x128xf32>,
    return
  }
  func.func @transform_0(%arg0: i32) -> (i32, i32, i32) {
    %c0_i32 = arith.constant 0 : i32
    %c0_i32_0 = arith.constant 0 : i32
    %c0_i32_1 = arith.constant 0 : i32
    return %arg0, %c0_i32, %c0_i32_0 : i32, i32, i32
  }
  func.func @transform_1(%arg0: i32) -> (i32, i32) {
    %c0_i32 = arith.constant 0 : i32
    %c0_i32_0 = arith.constant 0 : i32
    %c0_i32_1 = arith.constant 0 : i32
    return %c0_i32, %c0_i32_0 : i32, i32
  }
  func.func @transform_2(%arg0: i32) -> (i32, i32, i32) {
    %c0_i32 = arith.constant 0 : i32
    %c0_i32_0 = arith.constant 0 : i32
    %c0_i32_1 = arith.constant 0 : i32
    return %arg0, %c0_i32, %c0_i32_0 : i32, i32, i32
  }
}

</mosaic_0001>

<llo_original>
// kernel: forward.1
$region0: #{forward.1}
  #allocation0 [shape = 'u32[]', space=smem, size = 0x4, offset = 0x4, fixed_abs, tag = 'smem constant byte address 0x4 - core index']
  #allocation1 [shape = 'u32[144,128]{1,0:T(1,128)}', space=vmem, size = 0x12000, scoped, tag = 'internal scratch']
  %s0 = inlined_call_operand.vmem [shape: f32[2,8,4], index: 0, kind: input, shape index: {}]
  %s1 = inlined_call_operand.vmem [shape: f32[168,128], index: 1, kind: input, shape index: {}]
  %s2 = inlined_call_operand.vmem [shape: f32[2,8,128], index: 2, kind: output, shape index: {}]
  %s3 = sld [smem:[#allocation0]]
  $region41: #{forward.1} parent=0
    _
  %s5 = ssub.s32 1, %s3
  %s6 = scalar_select 0, %s5, %s3
  loop: start=0, step=1, limit=4
  $region2: #{forward.1} parent=0 // loop_pre_header
    _
  $region3: #{forward.1} parent=0 // loop_header
    %s8 = sphi 0, %s12
    %p9 = scmp.ge.s32.totalorder %s8, 4
    %s18 = sphi 0, %s20
    %s21 = sphi 0, %s18
    %s22 = sphi 0, %s21
    %s38 = sphi 0, %s22
    %s42 = sphi 0, %s42
    %s44 = sphi 0, %s42
    %s45 = sphi 0, %s44
    %s59 = sphi 0, %s45
    %s65 = sphi 0, %s67
    %s68 = sphi 0, %s65
    %s69 = sphi 0, %s68
    %s85 = sphi 0, %s69
  $region4: #{forward.1} parent=0 // loop_header_branch
    %11 = sbr.rel (%p9) target = $region8
  $region5: #{forward.1} parent=0 // loop_body
    %s13 = ssub.s32 %s8, 1
    %s14 = ssub.s32 %s8, 2
    %s15 = sadd.s32 %s8, 1
    %s16 = ssub.s32 %s8, %s15
    %p17 = scmp.eq.s32.totalorder %s16, 0
    %s19 = sadd.s32 %s18, 1
    %s20 = scalar_select %p17, %s18, %s19
    %p23 = pneg %p17
    %p24 = scmp.eq.s32.totalorder %s8, 1
    %p25 = por %p23, %p24
    %p26 = scmp.ne.s32.totalorder %s18, %s21
    %p27 = scmp.eq.s32.totalorder %s8, 0
    %p28 = por %p26, %p27
    %p29 = scmp.ne.s32.totalorder %s18, %s21
    %p30 = scmp.eq.s32.totalorder %s13, 1
    %p31 = por %p29, %p30
    %p32 = scmp.ne.s32.totalorder %s21, %s22
    %p33 = scmp.eq.s32.totalorder %s13, 0
    %p34 = por %p32, %p33
    %p35 = scmp.ne.s32.totalorder %s21, %s22
    %p36 = scmp.eq.s32.totalorder %s14, 1
    %p37 = por %p35, %p36
    %p39 = scmp.ne.s32.totalorder %s22, %s38
    %p40 = scmp.eq.s32.totalorder %s14, 0
    %p41 = por %p39, %p40
    %s43 = sadd.s32 %s42, 1
    %p46 = scmp.eq.s32.totalorder %s8, 1
    %p47 = scmp.ne.s32.totalorder %s42, %s44
    %p48 = scmp.eq.s32.totalorder %s8, 0
    %p49 = por %p47, %p48
    %p50 = scmp.ne.s32.totalorder %s42, %s44
    %p51 = scmp.eq.s32.totalorder %s13, 1
    %p52 = por %p50, %p51
    %p53 = scmp.ne.s32.totalorder %s44, %s45
    %p54 = scmp.eq.s32.totalorder %s13, 0
    %p55 = por %p53, %p54
    %p56 = scmp.ne.s32.totalorder %s44, %s45
    %p57 = scmp.eq.s32.totalorder %s14, 1
    %p58 = por %p56, %p57
    %p60 = scmp.ne.s32.totalorder %s45, %s59
    %p61 = scmp.eq.s32.totalorder %s14, 0
    %p62 = por %p60, %p61
    %s63 = ssub.s32 %s8, %s15
    %p64 = scmp.eq.s32.totalorder %s63, 0
    %s66 = sadd.s32 %s65, 1
    %s67 = scalar_select %p64, %s65, %s66
    %p70 = pneg %p64
    %p71 = scmp.eq.s32.totalorder %s8, 1
    %p72 = por %p70, %p71
    %p73 = scmp.ne.s32.totalorder %s65, %s68
    %p74 = scmp.eq.s32.totalorder %s8, 0
    %p75 = por %p73, %p74
    %p76 = scmp.ne.s32.totalorder %s65, %s68
    %p77 = scmp.eq.s32.totalorder %s13, 1
    %p78 = por %p76, %p77
    %p79 = scmp.ne.s32.totalorder %s68, %s69
    %p80 = scmp.eq.s32.totalorder %s13, 0
    %p81 = por %p79, %p80
    %p82 = scmp.ne.s32.totalorder %s68, %s69
    %p83 = scmp.eq.s32.totalorder %s14, 1
    %p84 = por %p82, %p83
    %p86 = scmp.ne.s32.totalorder %s69, %s85
    %p87 = scmp.eq.s32.totalorder %s14, 0
    %p88 = por %p86, %p87
    %p89 = scmp.le.s32.totalorder 1, %s8
    %p90 = scmp.lt.s32.totalorder %s8, 3
    %p91 = pnand %p89, %p90
    %p92 = pneg %p91
    // Predicated region
    $region9: #{forward.1} parent=5 // pred_check
      _
    $region10: #{forward.1} parent=5 // pred_check_branch
      %94 = sbr.rel (%p91) target = $region12
    $region11: #{forward.1} parent=5 // pred_region
      %s95 = ssub.s32 %s8, 1
      // Predicated region
      $region13: #{forward.1} parent=11 // pred_check
        %p96 = pneg %p55
      $region14: #{forward.1} parent=11 // pred_check_branch
        %98 = sbr.rel (%p96) target = $region16
      $region15: #{forward.1} parent=11 // pred_region
        _
      $region16: #{forward.1} parent=11 // pred_fallthru
        _
    $region12: #{forward.1} parent=5 // pred_fallthru
      _
    %p99 = scmp.lt.s32.totalorder %s8, 2
    // Predicated region
    $region17: #{forward.1} parent=5 // pred_check
      %p100 = pneg %p99
    $region18: #{forward.1} parent=5 // pred_check_branch
      %102 = sbr.rel (%p100) target = $region20
    $region19: #{forward.1} parent=5 // pred_region
      // Predicated region
      $region21: #{forward.1} parent=19 // pred_check
        %p103 = pneg %p28
      $region22: #{forward.1} parent=19 // pred_check_branch
        %105 = sbr.rel (%p103) target = $region24
      $region23: #{forward.1} parent=19 // pred_region
        %p106 = scmp.lt.s32.totalorder %s8, 1
        %s107 = scalar_select %p106, %s8, 1
        %s108 = smul.addr %s107, 8
        %s109 = scalar_lea.vmem %s0, %s108
      $region24: #{forward.1} parent=19 // pred_fallthru
        _
    $region20: #{forward.1} parent=5 // pred_fallthru
      _
    %p110 = scmp.le.s32.totalorder 1, %s8
    %p111 = scmp.lt.s32.totalorder %s8, 3
    %p112 = pnand %p110, %p111
    %p113 = pneg %p112
    // Predicated region
    $region25: #{forward.1} parent=5 // pred_check
      _
    $region26: #{forward.1} parent=5 // pred_check_branch
      %115 = sbr.rel (%p112) target = $region28
    $region27: #{forward.1} parent=5 // pred_region
      %s116 = ssub.s32 %s8, 1
      %p117 = scmp.lt.s32.totalorder %s13, 1
      %s118 = scalar_select %p117, %s13, 1
      %s119 = smul.addr %s118, 8
      %s120 = scalar_lea.vmem %s0, %s119
      %p121 = pneg %p34
      %p122 = pneg %p31
      %p123 = pneg %p55
      %p124 = pneg %p52
      %p125 = pneg %p81
      %p126 = pneg %p78
      %p127 = scmp.lt.s32.totalorder %s13, 1
      %s128 = scalar_select %p127, %s13, 1
      %s129 = smul.addr %s128, 8
      %s130 = scalar_lea.vmem %s2, %s129
      %p131 = scmp.lt.s32.totalorder %s13, 1
      %s132 = scalar_select %p131, %s13, 1
      %s133 = smul.addr %s132, 8
      %s134 = scalar_lea.vmem %s0, %s133
      %p135 = scmp.lt.s32.totalorder %s13, 1
      %s136 = scalar_select %p135, %s13, 1
      %s137 = smul.addr %s136, 8
      %s138 = scalar_lea.vmem %s2, %s137
      %v139 = vld [vmem:[%s134] sm:$0xff]
      %v140 = vld [vmem:[%s1] sm:$0xf]
      %v141 = vld [vmem:[%s1 + $0x8] sm:$0xff]
      %v142 = vld [vmem:[%s1 + $0x10] sm:$0xff]
      %vm143 = vcmask 31744
      %v145 = vsel %vm143, %v139, 0
      %vm147 = vcmask 1043456
      %v149 = vsel %vm147, %v140, 0
      %151 = vmatprep.subr.mxu0 0.0
      %152 = vmatpush1.msra.mxu0 %v149
      %153 = vmatprep.subr.mxu0 0.0
      %154 = vmatpush1.msra.mxu0 0.0
      %155 = vmatprep.subr.mxu0 0.0
      %156 = vmatpush1.msra.mxu0 0.0
      %157 = vmatprep.subr.mxu0 0.0
      %158 = vmatpush1.msra.mxu0 0.0
      %159 = vmatprep.subr.mxu0 0.0
      %160 = vmatpush1.msra.mxu0 0.0
      %161 = vmatprep.subr.mxu0 0.0
      %162 = vmatpush1.msra.mxu0 0.0
      %163 = vmatprep.subr.mxu0 0.0
      %164 = vmatpush1.msra.mxu0 0.0
      %165 = vmatprep.subr.mxu0 0.0
      %166 = vmatpush1.msra.mxu0 0.0
      %167 = vmatprep.subr.mxu0 0.0
      %168 = vmatpush1.msra.mxu0 0.0
      %169 = vmatprep.subr.mxu0 0.0
      %170 = vmatpush1.msra.mxu0 0.0
      %171 = vmatprep.subr.mxu0 0.0
      %172 = vmatpush1.msra.mxu0 0.0
      %173 = vmatprep.subr.mxu0 0.0
      %174 = vmatpush1.msra.mxu0 0.0
      %175 = vmatprep.subr.mxu0 0.0
      %176 = vmatpush1.msra.mxu0 0.0
      %177 = vmatprep.subr.mxu0 0.0
      %178 = vmatpush1.msra.mxu0 0.0
      %179 = vmatprep.subr.mxu0 0.0
      %180 = vmatpush1.msra.mxu0 0.0
      %181 = vmatprep.subr.mxu0 0.0
      %182 = vmatpush1.msra.mxu0 0.0
      %183 = vmatprep.subr.mxu0 0.0
      %184 = vmatpush1.msra.mxu0 0.0
      %185 = vmatprep.subr.mxu0 0.0
      %186 = vmatpush1.msra.mxu0 0.0
      %187 = vmatprep.subr.mxu0 0.0
      %188 = vmatpush1.msra.mxu0 0.0
      %189 = vmatprep.subr.mxu0 0.0
      %190 = vmatpush1.msra.mxu0 0.0
      %191 = vmatprep.subr.mxu0 0.0
      %192 = vmatpush1.msra.mxu0 0.0
      %193 = vmatprep.subr.mxu0 0.0
      %194 = vmatpush1.msra.mxu0 0.0
      %195 = vmatprep.subr.mxu0 0.0
      %196 = vmatpush1.msra.mxu0 0.0
      %197 = vmatprep.subr.mxu0 0.0
      %198 = vmatpush1.msra.mxu0 0.0
      %199 = vmatprep.subr.mxu0 0.0
      %200 = vmatpush1.msra.mxu0 0.0
      %201 = vmatprep.subr.mxu0 0.0
      %202 = vmatpush1.msra.mxu0 0.0
      %203 = vmatprep.subr.mxu0 0.0
      %204 = vmatpush1.msra.mxu0 0.0
      %205 = vmatprep.subr.mxu0 0.0
      %206 = vmatpush1.msra.mxu0 0.0
      %207 = vmatprep.subr.mxu0 0.0
      %208 = vmatpush1.msra.mxu0 0.0
      %209 = vmatprep.subr.mxu0 0.0
      %210 = vmatpush1.msra.mxu0 0.0
      %211 = vmatprep.subr.mxu0 0.0
      %212 = vmatpush1.msra.mxu0 0.0
      %213 = vmatprep.subr.mxu0 0.0
      %214 = vmatpush1.msra.mxu0 0.0
      %215 = vmatprep.mubr.f32.mxu0 0.0
      %216 = vmatmul.mubr.f32.gmra.mrb[0].mxu0 %v145
      %v217 = vpop.f32.mrb[0].mxu0
      %v218 = vadd.f32 %v141, %v217
      %v219 = vpop.f32.mrb[0].mxu0
      %220 = vdwg.mxu0
      %v221 = vld [vmem:[%s1 + $0x18] sm:$0xff]
      %v222 = vld [vmem:[%s1 + $0x28] sm:$0xff]
      %v223 = vld [vmem:[%s1 + $0x30] sm:$0xff]
      %v224 = vld [vmem:[%s1 + $0x38] sm:$0xff]
      %v225 = vld [vmem:[%s1 + $0x40] sm:$0xff]
      %v226 = vld [vmem:[%s1 + $0x98] sm:$0x1]
      %v227 = vld [vmem:[%s1 + $0x99] sm:$0x1]
      %v228 = vld [vmem:[%s1 + $0x9a] sm:$0x1]
      %v229 = vld [vmem:[%s1 + $0x9b] sm:$0x1]
      %v230 = vld [vmem:[%s1 + $0x9c] sm:$0x1]
      %vm231 = vcmask 64512
      %v233 = vsel %vm231, %v142, 0
      %235 = vmatprep.subr.mxu0 0.0
      %236 = vmatpush1.msra.mxu0 %v218
      %237 = vmatprep.subr.mxu0 0.0
      %238 = vmatpush1.msra.mxu0 0.0
      %239 = vmatprep.subr.mxu0 0.0
      %240 = vmatpush1.msra.mxu0 0.0
      %241 = vmatprep.subr.mxu0 0.0
      %242 = vmatpush1.msra.mxu0 0.0
      %243 = vmatprep.subr.mxu0 0.0
      %244 = vmatpush1.msra.mxu0 0.0
      %245 = vmatprep.subr.mxu0 0.0
      %246 = vmatpush1.msra.mxu0 0.0
      %247 = vmatprep.subr.mxu0 0.0
      %248 = vmatpush1.msra.mxu0 0.0
      %249 = vmatprep.subr.mxu0 0.0
      %250 = vmatpush1.msra.mxu0 0.0
      %251 = vmatprep.subr.mxu0 0.0
      %252 = vmatpush1.msra.mxu0 0.0
      %253 = vmatprep.subr.mxu0 0.0
      %254 = vmatpush1.msra.mxu0 0.0
      %255 = vmatprep.subr.mxu0 0.0
      %256 = vmatpush1.msra.mxu0 0.0
      %257 = vmatprep.subr.mxu0 0.0
      %258 = vmatpush1.msra.mxu0 0.0
      %259 = vmatprep.subr.mxu0 0.0
      %260 = vmatpush1.msra.mxu0 0.0
      %261 = vmatprep.subr.mxu0 0.0
      %262 = vmatpush1.msra.mxu0 0.0
      %263 = vmatprep.subr.mxu0 0.0
      %264 = vmatpush1.msra.mxu0 0.0
      %265 = vmatprep.subr.mxu0 0.0
      %266 = vmatpush1.msra.mxu0 0.0
      %267 = vmatprep.subr.mxu0 0.0
      %268 = vmatpush1.msra.mxu0 0.0
      %269 = vmatprep.subr.mxu0 0.0
      %270 = vmatpush1.msra.mxu0 0.0
      %271 = vmatprep.subr.mxu0 0.0
      %272 = vmatpush1.msra.mxu0 0.0
      %273 = vmatprep.subr.mxu0 0.0
      %274 = vmatpush1.msra.mxu0 0.0
      %275 = vmatprep.subr.mxu0 0.0
      %276 = vmatpush1.msra.mxu0 0.0
      %277 = vmatprep.subr.mxu0 0.0
      %278 = vmatpush1.msra.mxu0 0.0
      %279 = vmatprep.subr.mxu0 0.0
      %280 = vmatpush1.msra.mxu0 0.0
      %281 = vmatprep.subr.mxu0 0.0
      %282 = vmatpush1.msra.mxu0 0.0
      %283 = vmatprep.subr.mxu0 0.0
      %284 = vmatpush1.msra.mxu0 0.0
      %285 = vmatprep.subr.mxu0 0.0
      %286 = vmatpush1.msra.mxu0 0.0
      %287 = vmatprep.subr.mxu0 0.0
      %288 = vmatpush1.msra.mxu0 0.0
      %289 = vmatprep.subr.mxu0 0.0
      %290 = vmatpush1.msra.mxu0 0.0
      %291 = vmatprep.subr.mxu0 0.0
      %292 = vmatpush1.msra.mxu0 0.0
      %293 = vmatprep.subr.mxu0 0.0
      %294 = vmatpush1.msra.mxu0 0.0
      %295 = vmatprep.subr.mxu0 0.0
      %296 = vmatpush1.msra.mxu0 0.0
      %297 = vmatprep.subr.mxu0 0.0
      %298 = vmatpush1.msra.mxu0 0.0
      %299 = vmatprep.mubr.f32.mxu0 0.0
      %300 = vmatmul.mubr.f32.gmra.mrb[0].mxu0 %v233
      %v301 = vpop.f32.mrb[0].mxu0
      %v302 = vadd.f32 %v218, %v301
      %v303 = vpop.f32.mrb[0].mxu0
      %304 = vdwg.mxu0
      %v305 = vadd.f32 %v302, %v221
      %vm306 = vcmask 261120
      %v307 = vsel %vm306, %v305, 0.0
      %308 = vadd.xlane.f32.xlu0 %v307
      %v309 = vpop.xlane.xlu0 %308
      %v310 = vrcp.pop 32.0
      %v311 = vmul.f32 %v309, %v310
      %v312 = vsub.f32 %v305, %v311
      %v313 = vmul.f32 %v312, %v312
      %v314 = vsel %vm306, %v313, 0.0
      %315 = vadd.xlane.f32.xlu0 %v314
      %v316 = vpop.xlane.xlu0 %315
      %v317 = vmul.f32 %v316, %v310
      %v318 = vadd.f32 %v317, 1e-05
      %v319 = vrsqrt.pop %v318
      %v320 = vmul.f32 %v312, %v319
      %v321 = vlaneseq
      %v322 = vshrl.u32 %v321, 7
      %v323 = vsub.s32 0, %v322
      %v324 = vrot.slane %v227, %v323
      %v325 = vmul.f32 %v320, %v324
      %v326 = vlaneseq
      %v327 = vshrl.u32 %v326, 7
      %v328 = vsub.s32 0, %v327
      %v329 = vrot.slane %v228, %v328
      %v330 = vadd.f32 %v325, %v329
      %v331 = vlaneseq
      %v332 = vshrl.u32 %v331, 7
      %v333 = vsub.s32 0, %v332
      %v334 = vrot.slane %v226, %v333
      %v336 = vsel %vm306, %v330, 0
      %338 = vmatprep.subr.mxu0 0.0
      %339 = vmatpush1.msra.mxu0 %v222
      %340 = vmatprep.subr.mxu0 0.0
      %341 = vmatpush1.msra.mxu0 %v223
      %342 = vmatprep.subr.mxu0 0.0
      %343 = vmatpush1.msra.mxu0 %v224
      %344 = vmatprep.subr.mxu0 0.0
      %345 = vmatpush1.msra.mxu0 %v225
      %346 = vmatprep.subr.mxu0 0.0
      %347 = vmatpush1.msra.mxu0 0.0
      %348 = vmatprep.subr.mxu0 0.0
      %349 = vmatpush1.msra.mxu0 0.0
      %350 = vmatprep.subr.mxu0 0.0
      %351 = vmatpush1.msra.mxu0 0.0
      %352 = vmatprep.subr.mxu0 0.0
      %353 = vmatpush1.msra.mxu0 0.0
      %354 = vmatprep.subr.mxu0 0.0
      %355 = vmatpush1.msra.mxu0 0.0
      %356 = vmatprep.subr.mxu0 0.0
      %357 = vmatpush1.msra.mxu0 0.0
      %358 = vmatprep.subr.mxu0 0.0
      %359 = vmatpush1.msra.mxu0 0.0
      %360 = vmatprep.subr.mxu0 0.0
      %361 = vmatpush1.msra.mxu0 0.0
      %362 = vmatprep.subr.mxu0 0.0
      %363 = vmatpush1.msra.mxu0 0.0
      %364 = vmatprep.subr.mxu0 0.0
      %365 = vmatpush1.msra.mxu0 0.0
      %366 = vmatprep.subr.mxu0 0.0
      %367 = vmatpush1.msra.mxu0 0.0
      %368 = vmatprep.subr.mxu0 0.0
      %369 = vmatpush1.msra.mxu0 0.0
      %370 = vmatprep.subr.mxu0 0.0
      %371 = vmatpush1.msra.mxu0 0.0
      %372 = vmatprep.subr.mxu0 0.0
      %373 = vmatpush1.msra.mxu0 0.0
      %374 = vmatprep.subr.mxu0 0.0
      %375 = vmatpush1.msra.mxu0 0.0
      %376 = vmatprep.subr.mxu0 0.0
      %377 = vmatpush1.msra.mxu0 0.0
      %378 = vmatprep.subr.mxu0 0.0
      %379 = vmatpush1.msra.mxu0 0.0
      %380 = vmatprep.subr.mxu0 0.0
      %381 = vmatpush1.msra.mxu0 0.0
      %382 = vmatprep.subr.mxu0 0.0
      %383 = vmatpush1.msra.mxu0 0.0
      %384 = vmatprep.subr.mxu0 0.0
      %385 = vmatpush1.msra.mxu0 0.0
      %386 = vmatprep.subr.mxu0 0.0
      %387 = vmatpush1.msra.mxu0 0.0
      %388 = vmatprep.subr.mxu0 0.0
      %389 = vmatpush1.msra.mxu0 0.0
      %390 = vmatprep.subr.mxu0 0.0
      %391 = vmatpush1.msra.mxu0 0.0
      %392 = vmatprep.subr.mxu0 0.0
      %393 = vmatpush1.msra.mxu0 0.0
      %394 = vmatprep.subr.mxu0 0.0
      %395 = vmatpush1.msra.mxu0 0.0
      %396 = vmatprep.subr.mxu0 0.0
      %397 = vmatpush1.msra.mxu0 0.0
      %398 = vmatprep.subr.mxu0 0.0
      %399 = vmatpush1.msra.mxu0 0.0
      %400 = vmatprep.subr.mxu0 0.0
      %401 = vmatpush1.msra.mxu0 0.0
      %402 = vmatprep.mubr.f32.mxu0 0.0
      %403 = vmatmul.mubr.f32.gmra.mrb[0].mxu0 %v336
      %v404 = vpop.f32.mrb[0].mxu0
      %v405 = vadd.f32 %v334, %v404
      %v406 = vpop.f32.mrb[0].mxu0
      %407 = vdwg.mxu0
      %v408 = vadd.f32 %v405, %v330
      %v409 = vsel %vm306, %v408, 0.0
      %410 = vadd.xlane.f32.xlu0 %v409
      %v411 = vpop.xlane.xlu0 %410
      %v412 = vmul.f32 %v411, %v310
      %v413 = vsub.f32 %v408, %v412
      %v414 = vmul.f32 %v413, %v413
      %v415 = vsel %vm306, %v414, 0.0
      %416 = vadd.xlane.f32.xlu0 %v415
      %v417 = vpop.xlane.xlu0 %416
      %v418 = vmul.f32 %v417, %v310
      %v419 = vadd.f32 %v418, 1e-05
      %v420 = vrsqrt.pop %v419
      %v421 = vmul.f32 %v413, %v420
      %v422 = vlaneseq
      %v423 = vshrl.u32 %v422, 7
      %v424 = vsub.s32 0, %v423
      %v425 = vrot.slane %v229, %v424
      %v426 = vmul.f32 %v421, %v425
      %v427 = vlaneseq
      %v428 = vshrl.u32 %v427, 7
      %v429 = vsub.s32 0, %v428
      %v430 = vrot.slane %v230, %v429
      %v431 = vadd.f32 %v426, %v430
      %v432 = vld [vmem:[%s1 + $0x20] sm:$0xff]
      %v433 = vld [vmem:[%s1 + $0x48] sm:$0xff]
      %v434 = vld [vmem:[%s1 + $0x50] sm:$0xff]
      %v435 = vld [vmem:[%s1 + $0x58] sm:$0xff]
      %v436 = vld [vmem:[%s1 + $0x60] sm:$0xff]
      %v437 = vld [vmem:[%s1 + $0x9d] sm:$0x1]
      %v438 = vld [vmem:[%s1 + $0x9e] sm:$0x1]
      %v439 = vld [vmem:[%s1 + $0x9f] sm:$0x1]
      %v440 = vld [vmem:[%s1 + $0xa0] sm:$0x1]
      %v441 = vld [vmem:[%s1 + $0xa1] sm:$0x1]
      %442 = vmatprep.subr.mxu0 0.0
      %443 = vmatpush1.msra.mxu0 %v431
      %444 = vmatprep.subr.mxu0 0.0
      %445 = vmatpush1.msra.mxu0 0.0
      %446 = vmatprep.subr.mxu0 0.0
      %447 = vmatpush1.msra.mxu0 0.0
      %448 = vmatprep.subr.mxu0 0.0
      %449 = vmatpush1.msra.mxu0 0.0
      %450 = vmatprep.subr.mxu0 0.0
      %451 = vmatpush1.msra.mxu0 0.0
      %452 = vmatprep.subr.mxu0 0.0
      %453 = vmatpush1.msra.mxu0 0.0
      %454 = vmatprep.subr.mxu0 0.0
      %455 = vmatpush1.msra.mxu0 0.0
      %456 = vmatprep.subr.mxu0 0.0
      %457 = vmatpush1.msra.mxu0 0.0
      %458 = vmatprep.subr.mxu0 0.0
      %459 = vmatpush1.msra.mxu0 0.0
      %460 = vmatprep.subr.mxu0 0.0
      %461 = vmatpush1.msra.mxu0 0.0
      %462 = vmatprep.subr.mxu0 0.0
      %463 = vmatpush1.msra.mxu0 0.0
      %464 = vmatprep.subr.mxu0 0.0
      %465 = vmatpush1.msra.mxu0 0.0
      %466 = vmatprep.subr.mxu0 0.0
      %467 = vmatpush1.msra.mxu0 0.0
      %468 = vmatprep.subr.mxu0 0.0
      %469 = vmatpush1.msra.mxu0 0.0
      %470 = vmatprep.subr.mxu0 0.0
      %471 = vmatpush1.msra.mxu0 0.0
      %472 = vmatprep.subr.mxu0 0.0
      %473 = vmatpush1.msra.mxu0 0.0
      %474 = vmatprep.subr.mxu0 0.0
      %475 = vmatpush1.msra.mxu0 0.0
      %476 = vmatprep.subr.mxu0 0.0
      %477 = vmatpush1.msra.mxu0 0.0
      %478 = vmatprep.subr.mxu0 0.0
      %479 = vmatpush1.msra.mxu0 0.0
      %480 = vmatprep.subr.mxu0 0.0
      %481 = vmatpush1.msra.mxu0 0.0
      %482 = vmatprep.subr.mxu0 0.0
      %483 = vmatpush1.msra.mxu0 0.0
      %484 = vmatprep.subr.mxu0 0.0
      %485 = vmatpush1.msra.mxu0 0.0
      %486 = vmatprep.subr.mxu0 0.0
      %487 = vmatpush1.msra.mxu0 0.0
      %488 = vmatprep.subr.mxu0 0.0
      %489 = vmatpush1.msra.mxu0 0.0
      %490 = vmatprep.subr.mxu0 0.0
      %491 = vmatpush1.msra.mxu0 0.0
      %492 = vmatprep.subr.mxu0 0.0
      %493 = vmatpush1.msra.mxu0 0.0
      %494 = vmatprep.subr.mxu0 0.0
      %495 = vmatpush1.msra.mxu0 0.0
      %496 = vmatprep.subr.mxu0 0.0
      %497 = vmatpush1.msra.mxu0 0.0
      %498 = vmatprep.subr.mxu0 0.0
      %499 = vmatpush1.msra.mxu0 0.0
      %500 = vmatprep.subr.mxu0 0.0
      %501 = vmatpush1.msra.mxu0 0.0
      %502 = vmatprep.subr.mxu0 0.0
      %503 = vmatpush1.msra.mxu0 0.0
      %504 = vmatprep.subr.mxu0 0.0
      %505 = vmatpush1.msra.mxu0 0.0
      %506 = vmatprep.mubr.f32.mxu0 0.0
      %507 = vmatmul.mubr.f32.gmra.mrb[0].mxu0 %v233
      %v508 = vpop.f32.mrb[0].mxu0
      %v509 = vadd.f32 %v431, %v508
      %v510 = vpop.f32.mrb[0].mxu0
      %511 = vdwg.mxu0
      %v512 = vadd.f32 %v509, %v432
      %v513 = vsel %vm306, %v512, 0.0
      %514 = vadd.xlane.f32.xlu0 %v513
      %v515 = vpop.xlane.xlu0 %514
      %v516 = vmul.f32 %v515, %v310
      %v517 = vsub.f32 %v512, %v516
      %v518 = vmul.f32 %v517, %v517
      %v519 = vsel %vm306, %v518, 0.0
      %520 = vadd.xlane.f32.xlu0 %v519
      %v521 = vpop.xlane.xlu0 %520
      %v522 = vmul.f32 %v521, %v310
      %v523 = vadd.f32 %v522, 1e-05
      %v524 = vrsqrt.pop %v523
      %v525 = vmul.f32 %v517, %v524
      %v526 = vlaneseq
      %v527 = vshrl.u32 %v526, 7
      %v528 = vsub.s32 0, %v527
      %v529 = vrot.slane %v438, %v528
      %v530 = vmul.f32 %v525, %v529
      %v531 = vlaneseq
      %v532 = vshrl.u32 %v531, 7
      %v533 = vsub.s32 0, %v532
      %v534 = vrot.slane %v439, %v533
      %v535 = vadd.f32 %v530, %v534
      %v536 = vlaneseq
      %v537 = vshrl.u32 %v536, 7
      %v538 = vsub.s32 0, %v537
      %v539 = vrot.slane %v437, %v538
      %v541 = vsel %vm306, %v535, 0
      %543 = vmatprep.subr.mxu0 0.0
      %544 = vmatpush1.msra.mxu0 %v433
      %545 = vmatprep.subr.mxu0 0.0
      %546 = vmatpush1.msra.mxu0 %v434
      %547 = vmatprep.subr.mxu0 0.0
      %548 = vmatpush1.msra.mxu0 %v435
      %549 = vmatprep.subr.mxu0 0.0
      %550 = vmatpush1.msra.mxu0 %v436
      %551 = vmatprep.subr.mxu0 0.0
      %552 = vmatpush1.msra.mxu0 0.0
      %553 = vmatprep.subr.mxu0 0.0
      %554 = vmatpush1.msra.mxu0 0.0
      %555 = vmatprep.subr.mxu0 0.0
      %556 = vmatpush1.msra.mxu0 0.0
      %557 = vmatprep.subr.mxu0 0.0
      %558 = vmatpush1.msra.mxu0 0.0
      %559 = vmatprep.subr.mxu0 0.0
      %560 = vmatpush1.msra.mxu0 0.0
      %561 = vmatprep.subr.mxu0 0.0
      %562 = vmatpush1.msra.mxu0 0.0
      %563 = vmatprep.subr.mxu0 0.0
      %564 = vmatpush1.msra.mxu0 0.0
      %565 = vmatprep.subr.mxu0 0.0
      %566 = vmatpush1.msra.mxu0 0.0
      %567 = vmatprep.subr.mxu0 0.0
      %568 = vmatpush1.msra.mxu0 0.0
      %569 = vmatprep.subr.mxu0 0.0
      %570 = vmatpush1.msra.mxu0 0.0
      %571 = vmatprep.subr.mxu0 0.0
      %572 = vmatpush1.msra.mxu0 0.0
      %573 = vmatprep.subr.mxu0 0.0
      %574 = vmatpush1.msra.mxu0 0.0
      %575 = vmatprep.subr.mxu0 0.0
      %576 = vmatpush1.msra.mxu0 0.0
      %577 = vmatprep.subr.mxu0 0.0
      %578 = vmatpush1.msra.mxu0 0.0
      %579 = vmatprep.subr.mxu0 0.0
      %580 = vmatpush1.msra.mxu0 0.0
      %581 = vmatprep.subr.mxu0 0.0
      %582 = vmatpush1.msra.mxu0 0.0
      %583 = vmatprep.subr.mxu0 0.0
      %584 = vmatpush1.msra.mxu0 0.0
      %585 = vmatprep.subr.mxu0 0.0
      %586 = vmatpush1.msra.mxu0 0.0
      %587 = vmatprep.subr.mxu0 0.0
      %588 = vmatpush1.msra.mxu0 0.0
      %589 = vmatprep.subr.mxu0 0.0
      %590 = vmatpush1.msra.mxu0 0.0
      %591 = vmatprep.subr.mxu0 0.0
      %592 = vmatpush1.msra.mxu0 0.0
      %593 = vmatprep.subr.mxu0 0.0
      %594 = vmatpush1.msra.mxu0 0.0
      %595 = vmatprep.subr.mxu0 0.0
      %596 = vmatpush1.msra.mxu0 0.0
      %597 = vmatprep.subr.mxu0 0.0
      %598 = vmatpush1.msra.mxu0 0.0
      %599 = vmatprep.subr.mxu0 0.0
      %600 = vmatpush1.msra.mxu0 0.0
      %601 = vmatprep.subr.mxu0 0.0
      %602 = vmatpush1.msra.mxu0 0.0
      %603 = vmatprep.subr.mxu0 0.0
      %604 = vmatpush1.msra.mxu0 0.0
      %605 = vmatprep.subr.mxu0 0.0
      %606 = vmatpush1.msra.mxu0 0.0
      %607 = vmatprep.mubr.f32.mxu0 0.0
      %608 = vmatmul.mubr.f32.gmra.mrb[0].mxu0 %v541
      %v609 = vpop.f32.mrb[0].mxu0
      %v610 = vadd.f32 %v539, %v609
      %v611 = vpop.f32.mrb[0].mxu0
      %612 = vdwg.mxu0
      %v613 = vadd.f32 %v610, %v535
      %v614 = vsel %vm306, %v613, 0.0
      %615 = vadd.xlane.f32.xlu0 %v614
      %v616 = vpop.xlane.xlu0 %615
      %v617 = vmul.f32 %v616, %v310
      %v618 = vsub.f32 %v613, %v617
      %v619 = vmul.f32 %v618, %v618
      %v620 = vsel %vm306, %v619, 0.0
      %621 = vadd.xlane.f32.xlu0 %v620
      %v622 = vpop.xlane.xlu0 %621
      %v623 = vmul.f32 %v622, %v310
      %v624 = vadd.f32 %v623, 1e-05
      %v625 = vrsqrt.pop %v624
      %v626 = vmul.f32 %v618, %v625
      %v627 = vlaneseq
      %v628 = vshrl.u32 %v627, 7
      %v629 = vsub.s32 0, %v628
      %v630 = vrot.slane %v440, %v629
      %v631 = vmul.f32 %v626, %v630
      %v632 = vlaneseq
      %v633 = vshrl.u32 %v632, 7
      %v634 = vsub.s32 0, %v633
      %v635 = vrot.slane %v441, %v634
      %v636 = vadd.f32 %v631, %v635
      %v637 = vld [vmem:[%s1 + $0xa2] sm:$0x1]
      %v638 = vld [vmem:[%s1 + $0xa3] sm:$0x1]
      %v639 = vld [vmem:[%s1 + $0xa4] sm:$0x1]
      %v640 = vld [vmem:[%s1 + $0xa5] sm:$0x1]
      %v641 = vsel %vm306, %v636, 0.0
      %642 = vadd.xlane.f32.xlu0 %v641
      %v643 = vpop.xlane.xlu0 %642
      %v644 = vmul.f32 %v643, %v310
      %v645 = vsub.f32 %v636, %v644
      %v646 = vmul.f32 %v645, %v645
      %v647 = vsel %vm306, %v646, 0.0
      %648 = vadd.xlane.f32.xlu0 %v647
      %v649 = vpop.xlane.xlu0 %648
      %v650 = vmul.f32 %v649, %v310
      %v651 = vadd.f32 %v650, 1e-05
      %v652 = vrsqrt.pop %v651
      %v653 = vmul.f32 %v645, %v652
      %v654 = vlaneseq
      %v655 = vshrl.u32 %v654, 7
      %v656 = vsub.s32 0, %v655
      %v657 = vrot.slane %v637, %v656
      %v658 = vmul.f32 %v653, %v657
      %v659 = vlaneseq
      %v660 = vshrl.u32 %v659, 7
      %v661 = vsub.s32 0, %v660
      %v662 = vrot.slane %v638, %v661
      %v663 = vadd.f32 %v658, %v662
      %v664 = vld [vmem:[%s1 + $0x68] sm:$0xff]
      %v665 = vld [vmem:[%s1 + $0x70] sm:$0xff]
      %v666 = vld [vmem:[%s1 + $0x78] sm:$0xff]
      %v667 = vld [vmem:[%s1 + $0x80] sm:$0xff]
      %v668 = vld [vmem:[%s1 + $0x88] sm:$0xff]
      %v669 = vld [vmem:[%s1 + $0x90] sm:$0xff]
      %v670 = vlaneseq
      %v671 = vshrl.u32 %v670, 7
      %v672 = vsub.s32 0, %v671
      %v673 = vrot.slane %v639, %v672
      %v675 = vsel %vm306, %v663, 0
      %677 = vmatprep.subr.mxu0 0.0
      %678 = vmatpush1.msra.mxu0 %v664
      %679 = vmatprep.subr.mxu0 0.0
      %680 = vmatpush1.msra.mxu0 %v665
      %681 = vmatprep.subr.mxu0 0.0
      %682 = vmatpush1.msra.mxu0 %v666
      %683 = vmatprep.subr.mxu0 0.0
      %684 = vmatpush1.msra.mxu0 %v667
      %685 = vmatprep.subr.mxu0 0.0
      %686 = vmatpush1.msra.mxu0 0.0
      %687 = vmatprep.subr.mxu0 0.0
      %688 = vmatpush1.msra.mxu0 0.0
      %689 = vmatprep.subr.mxu0 0.0
      %690 = vmatpush1.msra.mxu0 0.0
      %691 = vmatprep.subr.mxu0 0.0
      %692 = vmatpush1.msra.mxu0 0.0
      %693 = vmatprep.subr.mxu0 0.0
      %694 = vmatpush1.msra.mxu0 0.0
      %695 = vmatprep.subr.mxu0 0.0
      %696 = vmatpush1.msra.mxu0 0.0
      %697 = vmatprep.subr.mxu0 0.0
      %698 = vmatpush1.msra.mxu0 0.0
      %699 = vmatprep.subr.mxu0 0.0
      %700 = vmatpush1.msra.mxu0 0.0
      %701 = vmatprep.subr.mxu0 0.0
      %702 = vmatpush1.msra.mxu0 0.0
      %703 = vmatprep.subr.mxu0 0.0
      %704 = vmatpush1.msra.mxu0 0.0
      %705 = vmatprep.subr.mxu0 0.0
      %706 = vmatpush1.msra.mxu0 0.0
      %707 = vmatprep.subr.mxu0 0.0
      %708 = vmatpush1.msra.mxu0 0.0
      %709 = vmatprep.subr.mxu0 0.0
      %710 = vmatpush1.msra.mxu0 0.0
      %711 = vmatprep.subr.mxu0 0.0
      %712 = vmatpush1.msra.mxu0 0.0
      %713 = vmatprep.subr.mxu0 0.0
      %714 = vmatpush1.msra.mxu0 0.0
      %715 = vmatprep.subr.mxu0 0.0
      %716 = vmatpush1.msra.mxu0 0.0
      %717 = vmatprep.subr.mxu0 0.0
      %718 = vmatpush1.msra.mxu0 0.0
      %719 = vmatprep.subr.mxu0 0.0
      %720 = vmatpush1.msra.mxu0 0.0
      %721 = vmatprep.subr.mxu0 0.0
      %722 = vmatpush1.msra.mxu0 0.0
      %723 = vmatprep.subr.mxu0 0.0
      %724 = vmatpush1.msra.mxu0 0.0
      %725 = vmatprep.subr.mxu0 0.0
      %726 = vmatpush1.msra.mxu0 0.0
      %727 = vmatprep.subr.mxu0 0.0
      %728 = vmatpush1.msra.mxu0 0.0
      %729 = vmatprep.subr.mxu0 0.0
      %730 = vmatpush1.msra.mxu0 0.0
      %731 = vmatprep.subr.mxu0 0.0
      %732 = vmatpush1.msra.mxu0 0.0
      %733 = vmatprep.subr.mxu0 0.0
      %734 = vmatpush1.msra.mxu0 0.0
      %735 = vmatprep.subr.mxu0 0.0
      %736 = vmatpush1.msra.mxu0 0.0
      %737 = vmatprep.subr.mxu0 0.0
      %738 = vmatpush1.msra.mxu0 0.0
      %739 = vmatprep.subr.mxu0 0.0
      %740 = vmatpush1.msra.mxu0 0.0
      %741 = vmatprep.mubr.f32.mxu0 0.0
      %742 = vmatmul.mubr.f32.gmra.mrb[0].mxu0 %v675
      %v743 = vpop.f32.mrb[0].mxu0
      %v744 = vadd.f32 %v673, %v743
      %v745 = vpop.f32.mrb[0].mxu0
      %746 = vdwg.mxu0
      %v747 = vmax.f32 %v744, 0.0
      %v748 = vlaneseq
      %v749 = vshrl.u32 %v748, 7
      %v750 = vsub.s32 0, %v749
      %v751 = vrot.slane %v640, %v750
      %vm752 = vcmask 130048
      %v754 = vsel %vm752, %v747, 0
      %756 = vmatprep.subr.mxu0 0.0
      %757 = vmatpush1.msra.mxu0 %v668
      %758 = vmatprep.subr.mxu0 0.0
      %759 = vmatpush1.msra.mxu0 %v669
      %760 = vmatprep.subr.mxu0 0.0
      %761 = vmatpush1.msra.mxu0 0.0
      %762 = vmatprep.subr.mxu0 0.0
      %763 = vmatpush1.msra.mxu0 0.0
      %764 = vmatprep.subr.mxu0 0.0
      %765 = vmatpush1.msra.mxu0 0.0
      %766 = vmatprep.subr.mxu0 0.0
      %767 = vmatpush1.msra.mxu0 0.0
      %768 = vmatprep.subr.mxu0 0.0
      %769 = vmatpush1.msra.mxu0 0.0
      %770 = vmatprep.subr.mxu0 0.0
      %771 = vmatpush1.msra.mxu0 0.0
      %772 = vmatprep.subr.mxu0 0.0
      %773 = vmatpush1.msra.mxu0 0.0
      %774 = vmatprep.subr.mxu0 0.0
      %775 = vmatpush1.msra.mxu0 0.0
      %776 = vmatprep.subr.mxu0 0.0
      %777 = vmatpush1.msra.mxu0 0.0
      %778 = vmatprep.subr.mxu0 0.0
      %779 = vmatpush1.msra.mxu0 0.0
      %780 = vmatprep.subr.mxu0 0.0
      %781 = vmatpush1.msra.mxu0 0.0
      %782 = vmatprep.subr.mxu0 0.0
      %783 = vmatpush1.msra.mxu0 0.0
      %784 = vmatprep.subr.mxu0 0.0
      %785 = vmatpush1.msra.mxu0 0.0
      %786 = vmatprep.subr.mxu0 0.0
      %787 = vmatpush1.msra.mxu0 0.0
      %788 = vmatprep.subr.mxu0 0.0
      %789 = vmatpush1.msra.mxu0 0.0
      %790 = vmatprep.subr.mxu0 0.0
      %791 = vmatpush1.msra.mxu0 0.0
      %792 = vmatprep.subr.mxu0 0.0
      %793 = vmatpush1.msra.mxu0 0.0
      %794 = vmatprep.subr.mxu0 0.0
      %795 = vmatpush1.msra.mxu0 0.0
      %796 = vmatprep.subr.mxu0 0.0
      %797 = vmatpush1.msra.mxu0 0.0
      %798 = vmatprep.subr.mxu0 0.0
      %799 = vmatpush1.msra.mxu0 0.0
      %800 = vmatprep.subr.mxu0 0.0
      %801 = vmatpush1.msra.mxu0 0.0
      %802 = vmatprep.subr.mxu0 0.0
      %803 = vmatpush1.msra.mxu0 0.0
      %804 = vmatprep.subr.mxu0 0.0
      %805 = vmatpush1.msra.mxu0 0.0
      %806 = vmatprep.subr.mxu0 0.0
      %807 = vmatpush1.msra.mxu0 0.0
      %808 = vmatprep.subr.mxu0 0.0
      %809 = vmatpush1.msra.mxu0 0.0
      %810 = vmatprep.subr.mxu0 0.0
      %811 = vmatpush1.msra.mxu0 0.0
      %812 = vmatprep.subr.mxu0 0.0
      %813 = vmatpush1.msra.mxu0 0.0
      %814 = vmatprep.subr.mxu0 0.0
      %815 = vmatpush1.msra.mxu0 0.0
      %816 = vmatprep.subr.mxu0 0.0
      %817 = vmatpush1.msra.mxu0 0.0
      %818 = vmatprep.subr.mxu0 0.0
      %819 = vmatpush1.msra.mxu0 0.0
      %820 = vmatprep.mubr.f32.mxu0 0.0
      %821 = vmatmul.mubr.f32.gmra.mrb[0].mxu0 %v754
      %v822 = vpop.f32.mrb[0].mxu0
      %v823 = vadd.f32 %v751, %v822
      %v824 = vpop.f32.mrb[0].mxu0
      %825 = vdwg.mxu0
      %826 = vst [vmem:[%s138] sm:$0xff] %v823
      %p827 = scmp.lt.s32.totalorder %s13, 1
      %s828 = scalar_select %p827, %s13, 1
      %s829 = smul.addr %s828, 8
      %s830 = scalar_lea.vmem %s2, %s829
      // Predicated region
      $region29: #{forward.1} parent=27 // pred_check
        %p831 = pneg %p78
      $region30: #{forward.1} parent=27 // pred_check_branch
        %833 = sbr.rel (%p831) target = $region32
      $region31: #{forward.1} parent=27 // pred_region
        _
      $region32: #{forward.1} parent=27 // pred_fallthru
        _
    $region28: #{forward.1} parent=5 // pred_fallthru
      _
    %p834 = scmp.le.s32.totalorder 2, %s8
    // Predicated region
    $region33: #{forward.1} parent=5 // pred_check
      %p835 = pneg %p834
    $region34: #{forward.1} parent=5 // pred_check_branch
      %837 = sbr.rel (%p835) target = $region36
    $region35: #{forward.1} parent=5 // pred_region
      %s838 = ssub.s32 %s8, 2
      // Predicated region
      $region37: #{forward.1} parent=35 // pred_check
        %p839 = pneg %p84
      $region38: #{forward.1} parent=35 // pred_check_branch
        %841 = sbr.rel (%p839) target = $region40
      $region39: #{forward.1} parent=35 // pred_region
        %p842 = scmp.lt.s32.totalorder %s14, 1
        %s843 = scalar_select %p842, %s14, 1
        %s844 = smul.addr %s843, 8
        %s845 = scalar_lea.vmem %s2, %s844
      $region40: #{forward.1} parent=35 // pred_fallthru
        _
    $region36: #{forward.1} parent=5 // pred_fallthru
      _
  $region6: #{forward.1} parent=0 // loop_footer
    %s12 = sadd.s32 1, %s8
  $region7: #{forward.1} parent=0 // loop_footer_branch
    %7 = sbr.rel target = $region3
  $region8: #{forward.1} parent=0 // loop_exit
    _

</llo_original>
